<compile_context>
chip_gen: v5e
topology: v5e:2x2
jax: 0.10.0
libtpu: 0.0.40
codegen_flags: <defaults>
</compile_context>

<pallas_src>
import jax
import jax.numpy as jnp
from jax import lax
from jax.experimental import pallas as pl
from jax.experimental.pallas import tpu as pltpu

# ---- small synthetic config (stand-in for encoder.config) ----
VOCAB = 100
HIDDEN = 128          # encoder.config.hidden_size
NUM_LAYERS = 4        # encoder.config.num_hidden_layers == self.split_layers
NUM_HEADS = 4
FFN = 256
SEQ = 8
BATCH = 2
NUM_CHOICES = 4
N_ROWS = BATCH * NUM_CHOICES   # flattened (batch * num_choices)


# ---------------------------------------------------------------------------
# Pallas kernel: per-layer head  dense -> tanh -> prediction -> CE (mean over batch)
# ---------------------------------------------------------------------------
def bert4race_head_kernel(label_ref, cls_ref, dwt_ref, bp_ref, loss_ref):
    _, N, H = cls_ref.shape
    B = label_ref.shape[0]
    C = N // B

    # ---- per-layer head: dense(H->H) -> tanh -> prediction(H->1) ----
    x = cls_ref[0]                         # [N, H] bf16 (MXU operand)
    w = dwt_ref[0]                         # [H, H] bf16, pre-transposed to [in, out]
    bp = bp_ref[0]                         # [2, H] f32: row 0 = dense bias, row 1 = pred w
    bias = bp[0:1, :]                      # [1, H]
    pw = bp[1:2, :]                        # [1, H]

    # pooled_output = tanh(self.denses[layer](hidden[:, 0]))
    # bf16 MXU matmul, f32 accumulation + f32 epilogue.
    pooled = jnp.tanh(
        jnp.dot(x, w, preferred_element_type=jnp.float32) + bias)   # [N, H] f32
    # dropout: identity (inference mode, hidden_dropout_prob not applied)
    # logits = self.predictions[layer](pooled).squeeze(-1)
    # Linear(H, 1, bias=False) as VPU multiply + lane reduce (pw is lane-dense [1,H]).
    logits = jnp.sum(pooled * pw, axis=-1, keepdims=True)           # [N, 1] f32

    # ---- per-choice-group cross entropy (all f32) ----
    # Choice-group / label one-hot masks built in-kernel from iota + SMEM label scalars.
    rows = lax.broadcasted_iota(jnp.int32, (N, B), 0)       # [N, B]
    cols = lax.broadcasted_iota(jnp.int32, (N, B), 1)       # [N, B]
    lo = cols * C
    grp = (rows >= lo) & (rows < lo + C)                    # row n belongs to example b
    tgt = lo
    for b in range(B):                                      # B is small & static
        tgt = jnp.where(cols == b, tgt + label_ref[b], tgt)
    sel = rows == tgt                                       # row n is the labelled choice

    neg = jnp.float32(-1e30)                                # f32-safe mask constant
    masked = jnp.where(grp, logits, neg)                    # [N, B]
    m = jnp.max(masked, axis=0, keepdims=True)              # [1, B]
    se = jnp.sum(jnp.where(grp, jnp.exp(masked - m), 0.0),
                 axis=0, keepdims=True)                     # [1, B]
    picked = jnp.sum(jnp.where(sel, logits, 0.0),
                     axis=0, keepdims=True)                 # [1, B]
    ce = jnp.log(se) + m - picked                           # [1, B] per-example CE
    # F.cross_entropy mean over batch for this layer; layers summed in the wrapper.
    loss_ref[0] = jnp.sum(ce, axis=1, keepdims=True) * jnp.float32(1.0 / B)


def bert4race_heads_loss(cls_states, dense_w, dense_b, pred_w, label):
    """cls_states: [L, N, H] f32;  dense_w: [L, H, H] (PyTorch [out,in]);
       dense_b: [L, H];  pred_w: [L, H] (Linear(H,1,bias=False) weight, squeezed);
       label: [B] int32.  Returns scalar summed-over-layers CE loss."""
    L, N, H = cls_states.shape
    # One-time parameter prep (outside the kernel, effectively free):
    #  * transpose dense weights to [L, in, out] -> natural MXU contraction in-kernel
    #  * cast both MXU operands to bf16 (post-matmul math stays f32)
    dwt = jnp.transpose(dense_w, (0, 2, 1)).astype(jnp.bfloat16)
    cls_bf16 = cls_states.astype(jnp.bfloat16)
    # Merge dense bias + prediction weight into one [L, 2, H] block (one DMA stream).
    bp = jnp.stack([dense_b, pred_w], axis=1).astype(jnp.float32)

    per_layer = pl.pallas_call(
        bert4race_head_kernel,
        out_shape=jax.ShapeDtypeStruct((L, 1, 1), jnp.float32),
        grid_spec=pltpu.PrefetchScalarGridSpec(
            num_scalar_prefetch=1,                # label lands in SMEM
            grid=(L,),                            # one layer per grid step
            in_specs=[
                pl.BlockSpec((1, N, H), lambda l, lab: (l, 0, 0)),  # CLS states (bf16)
                pl.BlockSpec((1, H, H), lambda l, lab: (l, 0, 0)),  # dense W [in,out] (bf16)
                pl.BlockSpec((1, 2, H), lambda l, lab: (l, 0, 0)),  # bias + pred w (f32)
            ],
            out_specs=pl.BlockSpec((1, 1, 1), lambda l, lab: (l, 0, 0)),
        ),
        compiler_params=pltpu.CompilerParams(
            dimension_semantics=("parallel",)),   # layers shardable across TCs (v7x)
    )(label, cls_bf16, dwt, bp)
    # sum(losses) over layers: one tiny XLA reduce in the wrapper.
    return jnp.sum(per_layer)


# ---------------------------------------------------------------------------
# Plain-JAX glue: small deterministic BERT-style encoder producing hidden states
# TODO(synk): stands in for AutoModel.from_pretrained(...) (no checkpoint load).
# ---------------------------------------------------------------------------
def layer_norm(x, g, b, eps=1e-12):
    mu = jnp.mean(x, axis=-1, keepdims=True)
    var = jnp.mean((x - mu) ** 2, axis=-1, keepdims=True)
    return (x - mu) * jax.lax.rsqrt(var + eps) * g + b


def init_encoder_params(key):
    ks = jax.random.split(key, 3 + NUM_LAYERS)

    def nrm(k, shape):
        return 0.02 * jax.random.normal(k, shape, jnp.float32)

    params = {
        "word_emb": nrm(ks[0], (VOCAB, HIDDEN)),
        "pos_emb": nrm(ks[1], (SEQ, HIDDEN)),
        "type_emb": nrm(ks[2], (2, HIDDEN)),
        "emb_ln_g": jnp.ones((HIDDEN,), jnp.float32),
        "emb_ln_b": jnp.zeros((HIDDEN,), jnp.float32),
        "layers": [],
    }
    for i in range(NUM_LAYERS):
        lk = jax.random.split(ks[3 + i], 6)
        params["layers"].append({
            "wq": nrm(lk[0], (HIDDEN, HIDDEN)), "bq": jnp.zeros((HIDDEN,), jnp.float32),
            "wk": nrm(lk[1], (HIDDEN, HIDDEN)), "bk": jnp.zeros((HIDDEN,), jnp.float32),
            "wv": nrm(lk[2], (HIDDEN, HIDDEN)), "bv": jnp.zeros((HIDDEN,), jnp.float32),
            "wo": nrm(lk[3], (HIDDEN, HIDDEN)), "bo": jnp.zeros((HIDDEN,), jnp.float32),
            "w1": nrm(lk[4], (HIDDEN, FFN)), "b1": jnp.zeros((FFN,), jnp.float32),
            "w2": nrm(lk[5], (FFN, HIDDEN)), "b2": jnp.zeros((HIDDEN,), jnp.float32),
            "ln1_g": jnp.ones((HIDDEN,), jnp.float32), "ln1_b": jnp.zeros((HIDDEN,), jnp.float32),
            "ln2_g": jnp.ones((HIDDEN,), jnp.float32), "ln2_b": jnp.zeros((HIDDEN,), jnp.float32),
        })
    return params


def encoder_forward(params, input_ids, attention_mask, token_type_ids):
    N, S = input_ids.shape
    x = (params["word_emb"][input_ids]
         + params["pos_emb"][jnp.arange(S)][None, :, :]
         + params["type_emb"][token_type_ids])
    x = layer_norm(x, params["emb_ln_g"], params["emb_ln_b"])
    hiddens = [x]
    ext_mask = (1.0 - attention_mask.astype(jnp.float32)) * -1e9        # [N, S]
    nh, dh = NUM_HEADS, HIDDEN // NUM_HEADS
    for p in params["layers"]:
        q = (x @ p["wq"] + p["bq"]).reshape(N, S, nh, dh).transpose(0, 2, 1, 3)
        k = (x @ p["wk"] + p["bk"]).reshape(N, S, nh, dh).transpose(0, 2, 1, 3)
        v = (x @ p["wv"] + p["bv"]).reshape(N, S, nh, dh).transpose(0, 2, 1, 3)
        scores = jnp.einsum("nhqd,nhkd->nhqk", q, k) / jnp.sqrt(jnp.float32(dh))
        scores = scores + ext_mask[:, None, None, :]
        attn = jax.nn.softmax(scores, axis=-1)
        ctx = jnp.einsum("nhqk,nhkd->nhqd", attn, v).transpose(0, 2, 1, 3).reshape(N, S, HIDDEN)
        x = layer_norm(x + ctx @ p["wo"] + p["bo"], p["ln1_g"], p["ln1_b"])
        h = jax.nn.gelu(x @ p["w1"] + p["b1"], approximate=False)
        x = layer_norm(x + h @ p["w2"] + p["b2"], p["ln2_g"], p["ln2_b"])
        hiddens.append(x)
    return hiddens


def heads_loss_ref(cls_states, dense_w, dense_b, pred_w, label):
    """Pure-JAX f32 reference for the Pallas head kernel (sanity check)."""
    total = 0.0
    for l in range(cls_states.shape[0]):
        pooled = jnp.tanh(cls_states[l] @ dense_w[l].T + dense_b[l])
        logits = (pooled @ pred_w[l]).reshape(-1, NUM_CHOICES)
        logz = jax.scipy.special.logsumexp(logits, axis=1)
        picked = jnp.take_along_axis(logits, label[:, None], axis=1)[:, 0]
        total = total + jnp.mean(logz - picked)
    return total


if __name__ == "__main__":
    key = jax.random.PRNGKey(0)
    k_enc, k_ids, k_type, k_lab, k_dw, k_db, k_pw = jax.random.split(key, 7)

    # inputs = [input_ids, label, attention_mask, token_type_ids]
    input_ids = jax.random.randint(k_ids, (BATCH, NUM_CHOICES, SEQ), 0, VOCAB, dtype=jnp.int32)
    attention_mask = jnp.ones((BATCH, NUM_CHOICES, SEQ), jnp.int32)
    token_type_ids = jax.random.randint(k_type, (BATCH, NUM_CHOICES, SEQ), 0, 2, dtype=jnp.int32)
    label = jax.random.randint(k_lab, (BATCH,), 0, NUM_CHOICES, dtype=jnp.int32)

    # Head parameters (self.denses / self.predictions), PyTorch Linear layout [out, in]
    dense_w = 0.02 * jax.random.normal(k_dw, (NUM_LAYERS, HIDDEN, HIDDEN), jnp.float32)
    dense_b = 0.02 * jax.random.normal(k_db, (NUM_LAYERS, HIDDEN), jnp.float32)
    pred_w = 0.02 * jax.random.normal(k_pw, (NUM_LAYERS, HIDDEN), jnp.float32)

    enc_params = init_encoder_params(k_enc)

    # forward: flatten (batch, num_choices) -> rows, run encoder, keep all hidden states
    ids_flat = input_ids.reshape(-1, SEQ)
    mask_flat = attention_mask.reshape(-1, SEQ)
    type_flat = token_type_ids.reshape(-1, SEQ)
    hiddens = encoder_forward(enc_params, ids_flat, mask_flat, type_flat)
    hidden_list = hiddens[1:]                               # split_layers == num_hidden_layers
    cls_states = jnp.stack([h[:, 0, :] for h in hidden_list], axis=0)   # [L, N, H]

    loss = bert4race_heads_loss(cls_states, dense_w, dense_b, pred_w, label)
    loss = jax.block_until_ready(loss)

    ref = heads_loss_ref(cls_states, dense_w, dense_b, pred_w, label)
    # bf16 MXU operands vs f32 reference: error is O(1e-3) at H=128, well inside 2e-2.
    assert bool(jnp.isfinite(loss)) and abs(float(loss) - float(ref)) < 2e-2, (loss, ref)
    print("KERNEL_OK")
</pallas_src>

<mosaic_0001>
module attributes {stable_mosaic.version = 11 : i64} {
  func.func @bert4race_head_kernel(%arg0: i32, %arg1: memref<2xi32, #tpu.memory_space<smem>>, %arg2: memref<1x8x128xbf16, #tpu.memory_space<vmem>>, %arg3: memref<1x128x128xbf16, #tpu.memory_space<vmem>>, %arg4: memref<1x2x128xf32, #tpu.memory_space<vmem>>, %arg5: memref<1x1x1xf32, #tpu.memory_space<vmem>>) attributes {dimension_semantics = [#tpu.dimension_semantics<parallel>], iteration_bounds = array<i64: 4>, scalar_prefetch = 1 : i64, scratch_operands = 0 : i64, tpu.core_type = #tpu.core_type<tc>, window_params = [{transform_indices = @transform_0, window_bounds = array<i64: 1, 8, 128>}, {transform_indices = @transform_1, window_bounds = array<i64: 1, 128, 128>}, {transform_indices = @transform_2, window_bounds = array<i64: 1, 2, 128>}, {transform_indices = @transform_3, window_bounds = array<i64: 1, 1, 1>}]} {
    %c0 = arith.constant 0 : index
    %c0_0 = arith.constant 0 : index
    %c0_1 = arith.constant 0 : index
    %0 = vector.load %arg2[%c0, %c0_0, %c0_1] : memref<1x8x128xbf16, #tpu.memory_space<vmem>>, vector<1x8x128xbf16>
    %1 = vector.shape_cast %0 : vector<1x8x128xbf16> to vector<8x128xbf16>
    %c0_2 = arith.constant 0 : index
    %c0_3 = arith.constant 0 : index
    %c0_4 = arith.constant 0 : index
    %2 = vector.load %arg3[%c0_2, %c0_3, %c0_4] : memref<1x128x128xbf16, #tpu.memory_space<vmem>>, vector<1x128x128xbf16>
    %3 = vector.shape_cast %2 : vector<1x128x128xbf16> to vector<128x128xbf16>
    %c0_5 = arith.constant 0 : index
    %c0_6 = arith.constant 0 : index
    %c0_7 = arith.constant 0 : index
    %4 = vector.load %arg4[%c0_5, %c0_6, %c0_7] : memref<1x2x128xf32, #tpu.memory_space<vmem>>, vector<1x2x128xf32>
    %5 = vector.shape_cast %4 : vector<1x2x128xf32> to vector<2x128xf32>
    %6 = vector.extract_strided_slice %5 {offsets = [0, 0], sizes = [1, 128], strides = [1, 1]} : vector<2x128xf32> to vector<1x128xf32>
    %7 = vector.extract_strided_slice %5 {offsets = [1, 0], sizes = [1, 128], strides = [1, 1]} : vector<2x128xf32> to vector<1x128xf32>
    %cst = arith.constant dense<0.000000e+00> : vector<8x128xf32>
    %8 = tpu.matmul %1, %3, %cst {dimension_numbers = #tpu.dot_dimension_numbers<[1], [0], [0], [1], [0, 0, 1, 1], [], []>} : vector<8x128xbf16>, vector<128x128xbf16>, vector<8x128xf32> -> vector<8x128xf32>
    %9 = vector.broadcast %6 : vector<1x128xf32> to vector<8x128xf32>
    %10 = arith.addf %8, %9 : vector<8x128xf32>
    %11 = math.tanh %10 : vector<8x128xf32>
    %12 = vector.broadcast %7 : vector<1x128xf32> to vector<8x128xf32>
    %13 = arith.mulf %11, %12 : vector<8x128xf32>
    %cst_8 = arith.constant dense<0.000000e+00> : vector<8xf32>
    %14 = vector.multi_reduction <add>, %13, %cst_8 [1] : vector<8x128xf32> to vector<8xf32>
    %15 = vector.shape_cast %14 : vector<8xf32> to vector<8x1xf32>
    %16 = tpu.iota {dimensions = array<i32: 0>} : vector<8x2xi32>
    %17 = tpu.iota {dimensions = array<i32: 1>} : vector<8x2xi32>
    %c4_i32 = arith.constant 4 : i32
    %18 = vector.broadcast %c4_i32 : i32 to vector<8x2xi32>
    %19 = arith.muli %17, %18 : vector<8x2xi32>
    %20 = arith.cmpi sge, %16, %19 : vector<8x2xi32>
    %c4_i32_9 = arith.constant 4 : i32
    %21 = vector.broadcast %c4_i32_9 : i32 to vector<8x2xi32>
    %22 = arith.addi %19, %21 : vector<8x2xi32>
    %23 = arith.cmpi slt, %16, %22 : vector<8x2xi32>
    %24 = arith.andi %20, %23 : vector<8x2xi1>
    %c0_i32 = arith.constant 0 : i32
    %25 = vector.broadcast %c0_i32 : i32 to vector<8x2xi32>
    %26 = arith.cmpi eq, %17, %25 : vector<8x2xi32>
    %c0_10 = arith.constant 0 : index
    %27 = memref.load %arg1[%c0_10] : memref<2xi32, #tpu.memory_space<smem>>
    %28 = vector.broadcast %27 : i32 to vector<8x2xi32>
    %29 = arith.addi %19, %28 : vector<8x2xi32>
    %30 = arith.select %26, %29, %19 : vector<8x2xi1>, vector<8x2xi32>
    %c1_i32 = arith.constant 1 : i32
    %31 = vector.broadcast %c1_i32 : i32 to vector<8x2xi32>
    %32 = arith.cmpi eq, %17, %31 : vector<8x2xi32>
    %c1 = arith.constant 1 : index
    %33 = memref.load %arg1[%c1] : memref<2xi32, #tpu.memory_space<smem>>
    %34 = vector.broadcast %33 : i32 to vector<8x2xi32>
    %35 = arith.addi %30, %34 : vector<8x2xi32>
    %36 = arith.select %32, %35, %30 : vector<8x2xi1>, vector<8x2xi32>
    %37 = arith.cmpi eq, %16, %36 : vector<8x2xi32>
    %cst_11 = arith.constant -1.000000e+30 : f32
    %38 = vector.shape_cast %15 : vector<8x1xf32> to vector<8x1xf32>
    %39 = vector.broadcast %38 : vector<8x1xf32> to vector<8x2xf32>
    %40 = vector.broadcast %cst_11 : f32 to vector<8x2xf32>
    %41 = arith.select %24, %39, %40 : vector<8x2xi1>, vector<8x2xf32>
    %cst_12 = arith.constant dense<0xFF800000> : vector<2xf32>
    %42 = vector.multi_reduction <maximumf>, %41, %cst_12 [0] : vector<8x2xf32> to vector<2xf32>
    %43 = vector.shape_cast %42 : vector<2xf32> to vector<1x2xf32>
    %44 = vector.broadcast %43 : vector<1x2xf32> to vector<8x2xf32>
    %45 = arith.subf %41, %44 : vector<8x2xf32>
    %46 = math.exp %45 : vector<8x2xf32>
    %cst_13 = arith.constant 0.000000e+00 : f32
    %47 = vector.broadcast %cst_13 : f32 to vector<8x2xf32>
    %48 = arith.select %24, %46, %47 : vector<8x2xi1>, vector<8x2xf32>
    %cst_14 = arith.constant dense<0.000000e+00> : vector<2xf32>
    %49 = vector.multi_reduction <add>, %48, %cst_14 [0] : vector<8x2xf32> to vector<2xf32>
    %50 = vector.shape_cast %49 : vector<2xf32> to vector<1x2xf32>
    %cst_15 = arith.constant 0.000000e+00 : f32
    %51 = vector.shape_cast %15 : vector<8x1xf32> to vector<8x1xf32>
    %52 = vector.broadcast %51 : vector<8x1xf32> to vector<8x2xf32>
    %53 = vector.broadcast %cst_15 : f32 to vector<8x2xf32>
    %54 = arith.select %37, %52, %53 : vector<8x2xi1>, vector<8x2xf32>
    %cst_16 = arith.constant dense<0.000000e+00> : vector<2xf32>
    %55 = vector.multi_reduction <add>, %54, %cst_16 [0] : vector<8x2xf32> to vector<2xf32>
    %56 = vector.shape_cast %55 : vector<2xf32> to vector<1x2xf32>
    %57 = math.log %50 : vector<1x2xf32>
    %58 = arith.addf %57, %43 : vector<1x2xf32>
    %59 = arith.subf %58, %56 : vector<1x2xf32>
    %cst_17 = arith.constant dense<0.000000e+00> : vector<1xf32>
    %60 = vector.multi_reduction <add>, %59, %cst_17 [1] : vector<1x2xf32> to vector<1xf32>
    %61 = vector.shape_cast %60 : vector<1xf32> to vector<1x1xf32>
    %cst_18 = arith.constant 5.000000e-01 : f32
    %62 = vector.broadcast %cst_18 : f32 to vector<1x1xf32>
    %63 = arith.mulf %61, %62 : vector<1x1xf32>
    %c0_19 = arith.constant 0 : index
    %c0_20 = arith.constant 0 : index
    %c0_21 = arith.constant 0 : index
    %64 = vector.load %arg5[%c0_19, %c0_20, %c0_21] : memref<1x1x1xf32, #tpu.memory_space<vmem>>, vector<1x1x1xf32>
    %65 = vector.shape_cast %64 : vector<1x1x1xf32> to vector<1x1xf32>
    %66 = vector.shape_cast %63 : vector<1x1xf32> to vector<1x1x1xf32>
    tpu.vector_store %arg5[%c0_19, %c0_20, %c0_21], %66 {strides = array<i32>} : memref<1x1x1xf32, #tpu.memory_space<vmem>>, vector<1x1x1xf32>,
    return
  }
  func.func @transform_0(%arg0: i32, %arg1: memref<2xi32, #tpu.memory_space<smem>>) -> (i32, i32, i32) {
    %c0_i32 = arith.constant 0 : i32
    %c0_i32_0 = arith.constant 0 : i32
    %c0_i32_1 = arith.constant 0 : i32
    return %arg0, %c0_i32, %c0_i32_0 : i32, i32, i32
  }
  func.func @transform_1(%arg0: i32, %arg1: memref<2xi32, #tpu.memory_space<smem>>) -> (i32, i32, i32) {
    %c0_i32 = arith.constant 0 : i32
    %c0_i32_0 = arith.constant 0 : i32
    %c0_i32_1 = arith.constant 0 : i32
    return %arg0, %c0_i32, %c0_i32_0 : i32, i32, i32
  }
  func.func @transform_2(%arg0: i32, %arg1: memref<2xi32, #tpu.memory_space<smem>>) -> (i32, i32, i32) {
    %c0_i32 = arith.constant 0 : i32
    %c0_i32_0 = arith.constant 0 : i32
    %c0_i32_1 = arith.constant 0 : i32
    return %arg0, %c0_i32, %c0_i32_0 : i32, i32, i32
  }
  func.func @transform_3(%arg0: i32, %arg1: memref<2xi32, #tpu.memory_space<smem>>) -> (i32, i32, i32) {
    %c0_i32 = arith.constant 0 : i32
    %c0_i32_0 = arith.constant 0 : i32
    %c0_i32_1 = arith.constant 0 : i32
    return %arg0, %c0_i32, %c0_i32_0 : i32, i32, i32
  }
}

</mosaic_0001>

<llo_original>
// kernel: tpu_custom_call.1
$region0: #{tpu_custom_call.1}
  #allocation0 [shape = 'u32[]', space=smem, size = 0x4, offset = 0x4, fixed_abs, tag = 'smem constant byte address 0x4 - core index']
  #allocation1 [shape = 'u32[72,128]{1,0:T(1,128)}', space=vmem, size = 0x9000, scoped, tag = 'internal scratch']
  #allocation2 [shape = 's32[1]{0}', space=sflag, size = 0x4, scoped, tag = 'scoped memory for tpu_custom_call.1']
  #allocation3 [shape = 'u8[512]{0}', space=smem, size = 0x200, scoped, tag = 'prefetched SMEM operand 0']
  %s0 = inlined_call_operand.hbm [shape: s32[2], index: 0, kind: input, shape index: {}]
  %s1 = inlined_call_operand.hbm [shape: bf16[4,8,128], index: 1, kind: input, shape index: {}]
  %s2 = inlined_call_operand.hbm [shape: bf16[4,128,128], index: 2, kind: input, shape index: {}]
  %s3 = inlined_call_operand.hbm [shape: f32[4,2,128], index: 3, kind: input, shape index: {}]
  %s4 = inlined_call_operand.vmem [shape: f32[4,1,1], index: 4, kind: output, shape index: {}]
  %s5 = sld [smem:[#allocation0]]
  $region57: #{tpu_custom_call.1} parent=0
    _
  %s7 = ssub.s32 1, %s5
  %s8 = scalar_select 0, %s7, %s5
  %s10 = sshll.u32 %s0, 4
  %s11 = int_to_ptr.hbm [resolvable:$true] %s10
  %13 = dma.hbm_to_smem %s11, 16, [#allocation3], [#allocation2]
  %15 = dma.done [#allocation2], 16
  %16 = sfence
  $region1: #{tpu_custom_call.1} parent=0
    #allocation4 [shape = 'u8[4096]{0}', space=vmem, size = 0x1000, scoped, tag = 'input window, operand 1']
    #allocation5 [shape = 's32[2]{0}', space=sflag, size = 0x8, scoped, tag = 'scoped memory for tpu_custom_call.1']
    #allocation6 [shape = 'u8[65536]{0}', space=vmem, size = 0x10000, scoped, tag = 'input window, operand 2']
    #allocation7 [shape = 's32[2]{0}', space=sflag, size = 0x8, scoped, tag = 'scoped memory for tpu_custom_call.1']
    #allocation8 [shape = 'u8[2048]{0}', space=vmem, size = 0x800, scoped, tag = 'input window, operand 3']
    %17 = vsyncpa [#allocation5], 0
    %s18 = scalar_lea.sflag [#allocation5], 1
    %19 = vsyncpa %s18, 0
    %20 = vsyncpa [#allocation7], 0
    %s21 = scalar_lea.sflag [#allocation7], 1
    %22 = vsyncpa %s21, 0
    loop: start=0, step=1, limit=6
    $region2: #{tpu_custom_call.1} parent=1 // loop_pre_header
      _
    $region3: #{tpu_custom_call.1} parent=1 // loop_header
      %s24 = sphi 0, %s28
      %p25 = scmp.ge.s32.totalorder %s24, 6
      %s34 = sphi 0, %s36
      %s37 = sphi 0, %s34
      %s38 = sphi 0, %s37
      %s54 = sphi 0, %s38
      %s60 = sphi 0, %s62
      %s63 = sphi 0, %s60
      %s64 = sphi 0, %s63
      %s80 = sphi 0, %s64
      %s86 = sphi 0, %s88
      %s89 = sphi 0, %s86
      %s90 = sphi 0, %s89
      %s106 = sphi 0, %s90
      %s112 = sphi 0, %s114
      %s115 = sphi 0, %s112
      %s116 = sphi 0, %s115
      %s132 = sphi 0, %s116
    $region4: #{tpu_custom_call.1} parent=1 // loop_header_branch
      %27 = sbr.rel (%p25) target = $region8
    $region5: #{tpu_custom_call.1} parent=1 // loop_body
      %s29 = ssub.s32 %s24, 1
      %s30 = ssub.s32 %s24, 2
      %s31 = sadd.s32 %s24, 1
      %s32 = ssub.s32 %s24, %s31
      %p33 = scmp.eq.s32.totalorder %s32, 0
      %s35 = sadd.s32 %s34, 1
      %s36 = scalar_select %p33, %s34, %s35
      %p39 = pneg %p33
      %p40 = scmp.eq.s32.totalorder %s24, 3
      %p41 = por %p39, %p40
      %p42 = scmp.ne.s32.totalorder %s34, %s37
      %p43 = scmp.eq.s32.totalorder %s24, 0
      %p44 = por %p42, %p43
      %p45 = scmp.ne.s32.totalorder %s34, %s37
      %p46 = scmp.eq.s32.totalorder %s29, 3
      %p47 = por %p45, %p46
      %p48 = scmp.ne.s32.totalorder %s37, %s38
      %p49 = scmp.eq.s32.totalorder %s29, 0
      %p50 = por %p48, %p49
      %p51 = scmp.ne.s32.totalorder %s37, %s38
      %p52 = scmp.eq.s32.totalorder %s30, 3
      %p53 = por %p51, %p52
      %p55 = scmp.ne.s32.totalorder %s38, %s54
      %p56 = scmp.eq.s32.totalorder %s30, 0
      %p57 = por %p55, %p56
      %s58 = ssub.s32 %s24, %s31
      %p59 = scmp.eq.s32.totalorder %s58, 0
      %s61 = sadd.s32 %s60, 1
      %s62 = scalar_select %p59, %s60, %s61
      %p65 = pneg %p59
      %p66 = scmp.eq.s32.totalorder %s24, 3
      %p67 = por %p65, %p66
      %p68 = scmp.ne.s32.totalorder %s60, %s63
      %p69 = scmp.eq.s32.totalorder %s24, 0
      %p70 = por %p68, %p69
      %p71 = scmp.ne.s32.totalorder %s60, %s63
      %p72 = scmp.eq.s32.totalorder %s29, 3
      %p73 = por %p71, %p72
      %p74 = scmp.ne.s32.totalorder %s63, %s64
      %p75 = scmp.eq.s32.totalorder %s29, 0
      %p76 = por %p74, %p75
      %p77 = scmp.ne.s32.totalorder %s63, %s64
      %p78 = scmp.eq.s32.totalorder %s30, 3
      %p79 = por %p77, %p78
      %p81 = scmp.ne.s32.totalorder %s64, %s80
      %p82 = scmp.eq.s32.totalorder %s30, 0
      %p83 = por %p81, %p82
      %s84 = ssub.s32 %s24, %s31
      %p85 = scmp.eq.s32.totalorder %s84, 0
      %s87 = sadd.s32 %s86, 1
      %s88 = scalar_select %p85, %s86, %s87
      %p91 = pneg %p85
      %p92 = scmp.eq.s32.totalorder %s24, 3
      %p93 = por %p91, %p92
      %p94 = scmp.ne.s32.totalorder %s86, %s89
      %p95 = scmp.eq.s32.totalorder %s24, 0
      %p96 = por %p94, %p95
      %p97 = scmp.ne.s32.totalorder %s86, %s89
      %p98 = scmp.eq.s32.totalorder %s29, 3
      %p99 = por %p97, %p98
      %p100 = scmp.ne.s32.totalorder %s89, %s90
      %p101 = scmp.eq.s32.totalorder %s29, 0
      %p102 = por %p100, %p101
      %p103 = scmp.ne.s32.totalorder %s89, %s90
      %p104 = scmp.eq.s32.totalorder %s30, 3
      %p105 = por %p103, %p104
      %p107 = scmp.ne.s32.totalorder %s90, %s106
      %p108 = scmp.eq.s32.totalorder %s30, 0
      %p109 = por %p107, %p108
      %s110 = ssub.s32 %s24, %s31
      %p111 = scmp.eq.s32.totalorder %s110, 0
      %s113 = sadd.s32 %s112, 1
      %s114 = scalar_select %p111, %s112, %s113
      %p117 = pneg %p111
      %p118 = scmp.eq.s32.totalorder %s24, 3
      %p119 = por %p117, %p118
      %p120 = scmp.ne.s32.totalorder %s112, %s115
      %p121 = scmp.eq.s32.totalorder %s24, 0
      %p122 = por %p120, %p121
      %p123 = scmp.ne.s32.totalorder %s112, %s115
      %p124 = scmp.eq.s32.totalorder %s29, 3
      %p125 = por %p123, %p124
      %p126 = scmp.ne.s32.totalorder %s115, %s116
      %p127 = scmp.eq.s32.totalorder %s29, 0
      %p128 = por %p126, %p127
      %p129 = scmp.ne.s32.totalorder %s115, %s116
      %p130 = scmp.eq.s32.totalorder %s30, 3
      %p131 = por %p129, %p130
      %p133 = scmp.ne.s32.totalorder %s116, %s132
      %p134 = scmp.eq.s32.totalorder %s30, 0
      %p135 = por %p133, %p134
      %p136 = scmp.le.s32.totalorder 1, %s24
      %p137 = scmp.lt.s32.totalorder %s24, 5
      %p138 = pnand %p136, %p137
      %p139 = pneg %p138
      // Predicated region
      $region9: #{tpu_custom_call.1} parent=5 // pred_check
        _
      $region10: #{tpu_custom_call.1} parent=5 // pred_check_branch
        %141 = sbr.rel (%p138) target = $region12
      $region11: #{tpu_custom_call.1} parent=5 // pred_region
        %s142 = ssub.s32 %s24, 1
      $region12: #{tpu_custom_call.1} parent=5 // pred_fallthru
        _
      %p143 = scmp.lt.s32.totalorder %s24, 4
      // Predicated region
      $region13: #{tpu_custom_call.1} parent=5 // pred_check
        %p144 = pneg %p143
      $region14: #{tpu_custom_call.1} parent=5 // pred_check_branch
        %146 = sbr.rel (%p144) target = $region16
      $region15: #{tpu_custom_call.1} parent=5 // pred_region
        // Predicated region
        $region17: #{tpu_custom_call.1} parent=15 // pred_check
          %p147 = pneg %p44
        $region18: #{tpu_custom_call.1} parent=15 // pred_check_branch
          %149 = sbr.rel (%p147) target = $region20
        $region19: #{tpu_custom_call.1} parent=15 // pred_region
          %s150 = sand.u32 %s34, 1
          %s151 = scalar_lea.sflag [#allocation5], %s150
          %s152 = sand.u32 %s34, 1
          %s153 = smul.addr %s152, 4
          %s154 = scalar_lea.vmem [#allocation4], %s153
          %156 = vsyncadd %s151, 0
          %s157 = smul.addr %s24, 4
          %s158 = scalar_lea.hbm %s1, %s157
          %s160 = sshll.u32 %s158, 4
          %s161 = int_to_ptr.hbm [resolvable:$true] %s160
          %s162 = sshll.u32 %s154, 4
          %s163 = int_to_ptr.vmem [resolvable:$true] %s162
          %165 = dma.hbm_to_vmem [thread:$0]  %s161, 64, %s163, %s151
        $region20: #{tpu_custom_call.1} parent=15 // pred_fallthru
          _
        // Predicated region
        $region21: #{tpu_custom_call.1} parent=15 // pred_check
          %p166 = pneg %p70
        $region22: #{tpu_custom_call.1} parent=15 // pred_check_branch
          %168 = sbr.rel (%p166) target = $region24
        $region23: #{tpu_custom_call.1} parent=15 // pred_region
          %s169 = sand.u32 %s24, 1
          %s170 = scalar_lea.sflag [#allocation7], %s169
          %s171 = sand.u32 %s60, 1
          %s172 = smul.addr %s171, 64
          %s173 = scalar_lea.vmem [#allocation6], %s172
          %175 = vsyncadd %s170, 0
          %s176 = smul.addr %s24, 16
          %s177 = smul.addr %s176, 4
          %s178 = scalar_lea.hbm %s2, %s177
          %s179 = sshll.u32 %s178, 4
          %s180 = int_to_ptr.hbm [resolvable:$true] %s179
          %s181 = sshll.u32 %s173, 4
          %s182 = int_to_ptr.vmem [resolvable:$true] %s181
          %187 = dma.hbm_to_vmem [thread:$0]  %s180, 1024, %s182, %s170, 64, 64, 4
        $region24: #{tpu_custom_call.1} parent=15 // pred_fallthru
          _
        // Predicated region
        $region25: #{tpu_custom_call.1} parent=15 // pred_check
          %p188 = pneg %p96
        $region26: #{tpu_custom_call.1} parent=15 // pred_check_branch
          %190 = sbr.rel (%p188) target = $region28
        $region27: #{tpu_custom_call.1} parent=15 // pred_region
          %s191 = sand.u32 %s24, 1
          %s192 = scalar_lea.sflag [#allocation7], %s191
          %s193 = sand.u32 %s86, 1
          %s194 = smul.addr %s193, 2
          %s195 = scalar_lea.vmem [#allocation8], %s194
          %197 = vsyncadd %s192, 0
          %s198 = smul.addr %s24, 2
          %s199 = scalar_lea.hbm %s3, %s198
          %s201 = sshll.u32 %s199, 4
          %s202 = int_to_ptr.hbm [resolvable:$true] %s201
          %s203 = sshll.u32 %s195, 4
          %s204 = int_to_ptr.vmem [resolvable:$true] %s203
          %206 = dma.hbm_to_vmem [thread:$0]  %s202, 32, %s204, %s192
        $region28: #{tpu_custom_call.1} parent=15 // pred_fallthru
          _
      $region16: #{tpu_custom_call.1} parent=5 // pred_fallthru
        _
      %p207 = scmp.le.s32.totalorder 1, %s24
      %p208 = scmp.lt.s32.totalorder %s24, 5
      %p209 = pnand %p207, %p208
      %p210 = pneg %p209
      // Predicated region
      $region29: #{tpu_custom_call.1} parent=5 // pred_check
        _
      $region30: #{tpu_custom_call.1} parent=5 // pred_check_branch
        %212 = sbr.rel (%p209) target = $region32
      $region31: #{tpu_custom_call.1} parent=5 // pred_region
        %s213 = ssub.s32 %s24, 1
        %s214 = sand.u32 %s37, 1
        %s215 = scalar_lea.sflag [#allocation5], %s214
        %s216 = sand.u32 %s37, 1
        %s217 = smul.addr %s216, 4
        %s218 = scalar_lea.vmem [#allocation4], %s217
        // Predicated region
        $region33: #{tpu_custom_call.1} parent=31 // pred_check
          %p219 = pneg %p50
        $region34: #{tpu_custom_call.1} parent=31 // pred_check_branch
          %221 = sbr.rel (%p219) target = $region36
        $region35: #{tpu_custom_call.1} parent=31 // pred_region
          %223 = dma.done %s215, 64
        $region36: #{tpu_custom_call.1} parent=31 // pred_fallthru
          _
        %s224 = sand.u32 %s29, 1
        %s225 = scalar_lea.sflag [#allocation7], %s224
        %s226 = sand.u32 %s63, 1
        %s227 = smul.addr %s226, 64
        %s228 = scalar_lea.vmem [#allocation6], %s227
        // Predicated region
        $region37: #{tpu_custom_call.1} parent=31 // pred_check
          %p229 = pneg %p76
        $region38: #{tpu_custom_call.1} parent=31 // pred_check_branch
          %231 = sbr.rel (%p229) target = $region40
        $region39: #{tpu_custom_call.1} parent=31 // pred_region
          %233 = dma.done %s225, 1024
        $region40: #{tpu_custom_call.1} parent=31 // pred_fallthru
          _
        %s234 = sand.u32 %s29, 1
        %s235 = scalar_lea.sflag [#allocation7], %s234
        %s236 = sand.u32 %s89, 1
        %s237 = smul.addr %s236, 2
        %s238 = scalar_lea.vmem [#allocation8], %s237
        // Predicated region
        $region41: #{tpu_custom_call.1} parent=31 // pred_check
          %p239 = pneg %p102
        $region42: #{tpu_custom_call.1} parent=31 // pred_check_branch
          %241 = sbr.rel (%p239) target = $region44
        $region43: #{tpu_custom_call.1} parent=31 // pred_region
          %243 = dma.done %s235, 32
        $region44: #{tpu_custom_call.1} parent=31 // pred_fallthru
          _
        %s244 = sand.u32 %s37, 1
        %s245 = scalar_lea.sflag [#allocation5], %s244
        %s246 = sand.u32 %s37, 1
        %s247 = smul.addr %s246, 4
        %s248 = scalar_lea.vmem [#allocation4], %s247
        %p249 = pneg %p50
        %p250 = pneg %p47
        %s251 = sand.u32 %s29, 1
        %s252 = scalar_lea.sflag [#allocation7], %s251
        %s253 = sand.u32 %s63, 1
        %s254 = smul.addr %s253, 64
        %s255 = scalar_lea.vmem [#allocation6], %s254
        %p256 = pneg %p76
        %p257 = pneg %p73
        %s258 = sand.u32 %s29, 1
        %s259 = scalar_lea.sflag [#allocation7], %s258
        %s260 = sand.u32 %s89, 1
        %s261 = smul.addr %s260, 2
        %s262 = scalar_lea.vmem [#allocation8], %s261
        %p263 = pneg %p102
        %p264 = pneg %p99
        %p265 = pneg %p128
        %p266 = pneg %p125
        %p267 = scmp.lt.s32.totalorder %s29, 3
        %s268 = scalar_select %p267, %s29, 3
        %s269 = scalar_lea.vmem %s4, %s268
        %p270 = scmp.lt.s32.totalorder %s29, 3
        %s271 = scalar_select %p270, %s29, 3
        %s272 = scalar_lea.vmem %s4, %s271
        %v273 = vld [vmem:[%s218] sm:$0xf]
        %v274 = vld [vmem:[%s228] sm:$0xf]
        %v275 = vld [vmem:[%s228 + $0x4] sm:$0xf]
        %v276 = vld [vmem:[%s228 + $0x8] sm:$0xf]
        %v277 = vld [vmem:[%s228 + $0xc] sm:$0xf]
        %v278 = vld [vmem:[%s228 + $0x10] sm:$0xf]
        %v279 = vld [vmem:[%s228 + $0x14] sm:$0xf]
        %v280 = vld [vmem:[%s228 + $0x18] sm:$0xf]
        %v281 = vld [vmem:[%s228 + $0x1c] sm:$0xf]
        %v282 = vld [vmem:[%s228 + $0x20] sm:$0xf]
        %v283 = vld [vmem:[%s228 + $0x24] sm:$0xf]
        %v284 = vld [vmem:[%s228 + $0x28] sm:$0xf]
        %v285 = vld [vmem:[%s228 + $0x2c] sm:$0xf]
        %v286 = vld [vmem:[%s228 + $0x30] sm:$0xf]
        %v287 = vld [vmem:[%s228 + $0x34] sm:$0xf]
        %v288 = vld [vmem:[%s228 + $0x38] sm:$0xf]
        %v289 = vld [vmem:[%s228 + $0x3c] sm:$0xf]
        %v290 = vld [vmem:[%s238] sm:$0x3]
        %v291 = vperm.slane %v290, 0
        %v308 = vunpack.c.l.b16 %v274
        %v309 = vunpack.c.l.b16 %v275
        %v310 = vunpack.c.l.b16 %v276
        %v311 = vunpack.c.l.b16 %v277
        %v312 = vunpack.c.l.b16 %v278
        %v313 = vunpack.c.l.b16 %v279
        %v314 = vunpack.c.l.b16 %v280
        %v315 = vunpack.c.l.b16 %v281
        %v316 = vunpack.c.l.b16 %v282
        %v317 = vunpack.c.l.b16 %v283
        %v318 = vunpack.c.l.b16 %v284
        %v319 = vunpack.c.l.b16 %v285
        %v320 = vunpack.c.l.b16 %v286
        %v321 = vunpack.c.l.b16 %v287
        %v322 = vunpack.c.l.b16 %v288
        %v323 = vunpack.c.l.b16 %v289
        %v324 = vpack.c.b16 %v309, %v308
        %v325 = vpack.c.b16 %v311, %v310
        %v326 = vpack.c.b16 %v313, %v312
        %v327 = vpack.c.b16 %v315, %v314
        %v328 = vpack.c.b16 %v317, %v316
        %v329 = vpack.c.b16 %v319, %v318
        %v330 = vpack.c.b16 %v321, %v320
        %v331 = vpack.c.b16 %v323, %v322
        %340 = vmatpush.bf16.msra.mxu0 %v331
        %341 = vmatpush.bf16.msra.mxu0 %v330
        %342 = vmatpush.bf16.msra.mxu0 %v329
        %343 = vmatpush.bf16.msra.mxu0 %v328
        %344 = vmatpush.bf16.msra.mxu0 %v327
        %345 = vmatpush.bf16.msra.mxu0 %v326
        %346 = vmatpush.bf16.msra.mxu0 %v325
        %347 = vmatpush.bf16.msra.mxu0 %v324
        %348 = vmatmul.bf16.gmra.mxu0 %v273
        %v349 = vpop.f32.mrf.mxu0
        %v350 = vadd.f32 %v291, %v349
        %v351 = vpop.f32.mrf.mxu0
        %352 = vdwg.mxu0
        %v353 = vtanh.pop %v350
        %v354 = vperm.slane %v290, 1
        %v355 = vmul.f32 %v353, %v354
        %356 = vadd.xlane.f32.xlu0 %v355
        %v357 = vpop.xlane.xlu0 %356
        %v358 = vlaneseq
        %v359 = vshrl.u32 %v358, 7
        %v360 = vlaneseq
        %v361 = vand.u32 %v360, 127
        %v362 = vmul.u32 %v361, 4
        %vm363 = vcmp.ge.s32.totalorder %v359, %v362
        %v364 = vadd.s32 %v362, 4
        %vm365 = vcmp.lt.s32.totalorder %v359, %v364
        %vm366 = vmand %vm363, %vm365
        %vm367 = vcmp.eq.s32.totalorder %v361, 0
        %s368 = sld [smem:[#allocation3]]
        %v369 = vstv %s368
        %v370 = vadd.s32 %v362, %v369
        %v371 = vsel %vm367, %v370, %v362
        %vm372 = vcmp.eq.s32.totalorder %v361, 1
        %s373 = sld [smem:[#allocation3 + $0x1]]
        %v374 = vstv %s373
        %v375 = vadd.s32 %v371, %v374
        %v376 = vsel %vm372, %v375, %v371
        %vm377 = vcmp.eq.s32.totalorder %v359, %v376
        %v378 = vsel %vm366, %v357, -1e+30
        %vm379 = vcmask 15360
        %v380 = vsel %vm379, %v378, -inf
        %v381 = vrot.slane %v380, 4
        %v382 = vmax.f32 %v380, %v381
        %v383 = vrot.slane %v382, 2
        %v384 = vmax.f32 %v382, %v383
        %v385 = vrot.slane %v384, 1
        %v386 = vmax.f32 %v384, %v385
        %v387 = vsub.f32 %v378, %v386
        %v388 = vmul.f32 %v387, 1.442695
        %v389 = vpow.pop %v388
        %v390 = vsel %vm366, %v389, 0.0
        %v391 = vsel %vm379, %v390, 0.0
        %v392 = vrot.slane %v391, 4
        %v393 = vadd.f32 %v391, %v392
        %v394 = vrot.slane %v393, 2
        %v395 = vadd.f32 %v393, %v394
        %v396 = vrot.slane %v395, 1
        %v397 = vadd.f32 %v395, %v396
        %v398 = vsel %vm377, %v357, 0.0
        %v399 = vsel %vm379, %v398, 0.0
        %v400 = vrot.slane %v399, 4
        %v401 = vadd.f32 %v399, %v400
        %v402 = vrot.slane %v401, 2
        %v403 = vadd.f32 %v401, %v402
        %v404 = vrot.slane %v403, 1
        %v405 = vadd.f32 %v403, %v404
        %v406 = vlog2.pop %v397
        %v407 = vmul.f32 %v406, 0.6931472
        %v408 = vadd.f32 %v407, %v386
        %v409 = vsub.f32 %v408, %v405
        %v410 = vsel %vm379, %v409, 0.0
        %411 = vadd.xlane.f32.xlu0 %v410
        %v412 = vpop.xlane.xlu0 %411
        %v413 = vmul.f32 %v412, 0.5
        %vm414 = vcmask 0
        %415 = vst.msk [vmem:[%s272] sm:$0x1] %vm414, %v413
        %p416 = scmp.lt.s32.totalorder %s29, 3
        %s417 = scalar_select %p416, %s29, 3
        %s418 = scalar_lea.vmem %s4, %s417
        // Predicated region
        $region45: #{tpu_custom_call.1} parent=31 // pred_check
          %p419 = pneg %p125
        $region46: #{tpu_custom_call.1} parent=31 // pred_check_branch
          %421 = sbr.rel (%p419) target = $region48
        $region47: #{tpu_custom_call.1} parent=31 // pred_region
          _
        $region48: #{tpu_custom_call.1} parent=31 // pred_fallthru
          _
      $region32: #{tpu_custom_call.1} parent=5 // pred_fallthru
        _
      %p422 = scmp.le.s32.totalorder 2, %s24
      // Predicated region
      $region49: #{tpu_custom_call.1} parent=5 // pred_check
        %p423 = pneg %p422
      $region50: #{tpu_custom_call.1} parent=5 // pred_check_branch
        %425 = sbr.rel (%p423) target = $region52
      $region51: #{tpu_custom_call.1} parent=5 // pred_region
        %s426 = ssub.s32 %s24, 2
        // Predicated region
        $region53: #{tpu_custom_call.1} parent=51 // pred_check
          %p427 = pneg %p131
        $region54: #{tpu_custom_call.1} parent=51 // pred_check_branch
          %429 = sbr.rel (%p427) target = $region56
        $region55: #{tpu_custom_call.1} parent=51 // pred_region
          %p430 = scmp.lt.s32.totalorder %s30, 3
          %s431 = scalar_select %p430, %s30, 3
          %s432 = scalar_lea.vmem %s4, %s431
        $region56: #{tpu_custom_call.1} parent=51 // pred_fallthru
          _
      $region52: #{tpu_custom_call.1} parent=5 // pred_fallthru
        _
    $region6: #{tpu_custom_call.1} parent=1 // loop_footer
      %s28 = sadd.s32 1, %s24
    $region7: #{tpu_custom_call.1} parent=1 // loop_footer_branch
      %23 = sbr.rel target = $region3
    $region8: #{tpu_custom_call.1} parent=1 // loop_exit
      _
    %433 = vsyncpa [#allocation5], 1
    %s434 = scalar_lea.sflag [#allocation5], 1
    %435 = vsyncpa %s434, 1
    %436 = vsyncpa [#allocation7], 1
    %s437 = scalar_lea.sflag [#allocation7], 1
    %438 = vsyncpa %s437, 1

</llo_original>
